<compile_context>
chip_gen: v7x
topology: tpu7x:2x2x1
jax: 0.10.0
libtpu: 0.0.40
codegen_flags: <defaults>
</compile_context>

<pallas_src>
import functools
import math

import jax
import jax.numpy as jnp
from jax import lax
from jax.experimental import pallas as pl
from jax.experimental.pallas import tpu as pltpu

EPS = 1e-5          # nn.LayerNorm default
TOKEN_TARGET = 256  # target tokens (MXU M dim) per program: 256 native on v6e/v7x


# ----------------------------------------------------------------------------
# In-kernel helpers (traced inside the Pallas kernels)
# ----------------------------------------------------------------------------
def _layernorm(x, gamma, beta):
    mu = jnp.mean(x, axis=-1, keepdims=True)
    var = jnp.mean((x - mu) ** 2, axis=-1, keepdims=True)
    return (x - mu) * lax.rsqrt(var + EPS) * gamma + beta


def _gelu_exact(x):
    # nn.GELU() default = exact erf-based GELU (f32 statistics)
    return 0.5 * x * (1.0 + lax.erf(x * (1.0 / math.sqrt(2.0))))


def _matmul_nt(x, w, out_dtype=jnp.float32):
    # y = x @ w.T without materializing the transpose; bf16 in, f32 MXU accum,
    # result emitted directly in `out_dtype` (bf16 when the only consumer is
    # another bf16 MXU matmul).
    return lax.dot_general(
        x, w, dimension_numbers=(((1,), (1,)), ((), ())),
        preferred_element_type=out_dtype)


# ----------------------------------------------------------------------------
# Capability probe: single-buffered (pipeline_mode=pl.Buffered(1)) BlockSpecs
# ----------------------------------------------------------------------------
_BUFFERED_SUPPORTED = None


def _buffered_supported():
    global _BUFFERED_SUPPORTED
    if _BUFFERED_SUPPORTED is None:
        try:
            def _probe_kernel(a_ref, w_ref, o_ref):
                o_ref[...] = a_ref[...] + w_ref[...]

            out = pl.pallas_call(
                _probe_kernel,
                out_shape=jax.ShapeDtypeStruct((16, 128), jnp.float32),
                grid=(2,),
                in_specs=[
                    pl.BlockSpec((8, 128), lambda i: (i, 0)),
                    pl.BlockSpec((8, 128), lambda i: (0, 0),
                                 pipeline_mode=pl.Buffered(1)),
                ],
                out_specs=pl.BlockSpec((8, 128), lambda i: (i, 0)),
            )(jnp.ones((16, 128), jnp.float32), jnp.ones((8, 128), jnp.float32))
            jax.block_until_ready(out)
            _BUFFERED_SUPPORTED = True
        except Exception:
            _BUFFERED_SUPPORTED = False
    return _BUFFERED_SUPPORTED


def _const_spec(shape):
    # Constant-index (grid-invariant) operand: fetched once; single-buffered
    # when supported so weights don't occupy 2x VMEM (critical on v7x 64 MiB).
    nd = len(shape)
    idx = lambda i, _nd=nd: (0,) * _nd
    if _buffered_supported():
        return pl.BlockSpec(shape, idx, pipeline_mode=pl.Buffered(1))
    return pl.BlockSpec(shape, idx)


# ----------------------------------------------------------------------------
# VMEM budgeting
# ----------------------------------------------------------------------------
def _nbytes(arr):
    return int(arr.size) * arr.dtype.itemsize


def _physical_vmem_bytes():
    try:
        return int(pltpu.get_tpu_info().vmem_capacity_bytes)
    except Exception:
        return 64 << 20  # conservative default (v7x per-core VMEM)


def _layer_vmem_bytes(bb, N, D, I, H, const_bytes, bias_block_bytes):
    """Real per-program footprint: pipeline buffers + in-kernel intermediates."""
    m = bb * N
    blocks = 2 * (bb * N * D * 2)        # x input block, bf16, double-buffered
    blocks += 2 * (bb * N * D * 4)       # output block (worst case f32), double-buffered
    blocks += const_bytes                # weights / LN params (single-buffered)
    blocks += 2 * bias_block_bytes       # attention bias block
    inter = (2 * m * D * 4               # f32 residual stream + f32 attn/ffn outputs
             + 5 * m * D * 2             # xn, q, k, v, o (bf16)
             + bb * H * N * N * 6        # scores f32 + probs bf16
             + m * I * 6)                # FFN hidden f32 + bf16
    return blocks + inter


def _vmem_limit(est_bytes):
    phys = _physical_vmem_bytes()
    cap = max(phys - (8 << 20), 16 << 20)   # headroom for Mosaic internal scratch
    return int(min(max(int(est_bytes) + (4 << 20), 24 << 20), cap))


# ----------------------------------------------------------------------------
# Kernels
# ----------------------------------------------------------------------------
def patch_embed_kernel(x_ref, w_ref, b_ref, o_ref):
    # x_ref: (tm, P) bf16   w_ref: (D, P) bf16   b_ref: (1, D) f32   o_ref: (tm, D) bf16
    y = _matmul_nt(x_ref[...], w_ref[...]) + b_ref[...]
    o_ref[...] = y.astype(o_ref.dtype)


def transformer_layer_kernel(
    x_ref, bias_ref,
    ln1_g_ref, ln1_b_ref, wq_ref, wk_ref, wv_ref, wo_ref, bo_ref,
    ln2_g_ref, ln2_b_ref, w1_ref, b1_ref, w2_ref, b2_ref,
    fin_g_ref, fin_b_ref,
    o_ref, *, heads, apply_final_ln, bias_per_batch,
):
    # x_ref: (bb, N, D) bf16 residual stream (f32 math inside)
    # bias_ref: (H, N, N) f32 shared, or (bb, H, N, N) f32 per-batch
    bb, n, d = x_ref.shape
    h = heads
    dh = d // h
    m = bb * n

    x = x_ref[...].reshape(m, d).astype(jnp.float32)          # (m, D) f32

    # ---------------- attention (pre-LN) ----------------
    xn = _layernorm(x, ln1_g_ref[...], ln1_b_ref[...]).astype(jnp.bfloat16)
    # q/k/v emitted directly in bf16 (only consumers are bf16 MXU matmuls);
    # the 1/sqrt(dh) scale is already folded into wq.
    q = _matmul_nt(xn, wq_ref[...], jnp.bfloat16)              # (m, D)
    k = _matmul_nt(xn, wk_ref[...], jnp.bfloat16)
    v = _matmul_nt(xn, wv_ref[...], jnp.bfloat16)

    # one explicit head-major relayout: (m, D) -> (bb*h, n, dh)
    q = q.reshape(bb, n, h, dh).transpose(0, 2, 1, 3).reshape(bb * h, n, dh)
    k = k.reshape(bb, n, h, dh).transpose(0, 2, 1, 3).reshape(bb * h, n, dh)
    v = v.reshape(bb, n, h, dh).transpose(0, 2, 1, 3).reshape(bb * h, n, dh)

    s = jnp.einsum('gnd,gmd->gnm', q, k,
                   preferred_element_type=jnp.float32)          # (bb*h, n, n) f32
    s = s.reshape(bb, h, n, n)
    if bias_per_batch:
        s = s + bias_ref[...]
    else:
        s = s + bias_ref[...][None]                             # shared ALiBi bias
    s = s - jnp.max(s, axis=-1, keepdims=True)
    p = jnp.exp(s)
    p = p * pl.reciprocal(jnp.sum(p, axis=-1, keepdims=True), approx=True)
    p = p.reshape(bb * h, n, n).astype(jnp.bfloat16)

    o = jnp.einsum('gnm,gmd->gnd', p, v,
                   preferred_element_type=jnp.bfloat16)         # (bb*h, n, dh) bf16
    o = o.reshape(bb, h, n, dh).transpose(0, 2, 1, 3).reshape(m, d)

    attn = _matmul_nt(o, wo_ref[...]) + bo_ref[...]             # (m, D) f32
    x = x + attn                                                # residual

    # ---------------- FFN (pre-LN) ----------------
    xn2 = _layernorm(x, ln2_g_ref[...], ln2_b_ref[...]).astype(jnp.bfloat16)
    hdn = _matmul_nt(xn2, w1_ref[...]) + b1_ref[...]            # (m, I) f32
    hdn = _gelu_exact(hdn)
    y = _matmul_nt(hdn.astype(jnp.bfloat16), w2_ref[...]) + b2_ref[...]
    x = x + y                                                   # residual

    if apply_final_ln:     # final LayerNorm folded into the last layer's kernel
        x = _layernorm(x, fin_g_ref[...], fin_b_ref[...])
    o_ref[...] = x.reshape(bb, n, d).astype(o_ref.dtype)


def layernorm_tokens_kernel(x_ref, g_ref, b_ref, o_ref):
    # fallback path (only used if there are zero transformer layers)
    x = x_ref[...].astype(jnp.float32)
    o_ref[...] = _layernorm(x, g_ref[...], b_ref[...]).astype(o_ref.dtype)


# ----------------------------------------------------------------------------
# pallas_call wrappers
# ----------------------------------------------------------------------------
def patch_embed(x2d, w, b, *, token_tile=TOKEN_TARGET):
    # x2d: (B*N, P) bf16 -> (B*N, D) bf16, token-tiled grid (batch folded into M).
    T, P = x2d.shape
    D = w.shape[0]
    tm = T if T <= token_tile else max(8, (token_tile // 8) * 8)
    est = (2 * (tm * P * 2) + 2 * (tm * D * 2) + _nbytes(w) + _nbytes(b)
           + tm * D * 4)
    return pl.pallas_call(
        patch_embed_kernel,
        out_shape=jax.ShapeDtypeStruct((T, D), jnp.bfloat16),
        grid=(pl.cdiv(T, tm),),
        in_specs=[pl.BlockSpec((tm, P), lambda i: (i, 0)),
                  _const_spec(w.shape), _const_spec(b.shape)],
        out_specs=pl.BlockSpec((tm, D), lambda i: (i, 0)),
        compiler_params=pltpu.CompilerParams(
            dimension_semantics=("parallel",),
            vmem_limit_bytes=_vmem_limit(est)),
    )(x2d, w, b)


def transformer_layer(x, bias, blk, fin_g, fin_b, heads, *, shared_bias,
                      apply_final_ln):
    B, N, D = x.shape
    H = heads
    I = blk["w1"].shape[0]

    const_args = (blk["attn_ln_g"], blk["attn_ln_b"],
                  blk["wq"], blk["wk"], blk["wv"], blk["wo"], blk["bo"],
                  blk["ffn_ln_g"], blk["ffn_ln_b"],
                  blk["w1"], blk["b1"], blk["w2"], blk["b2"],
                  fin_g, fin_b)
    const_bytes = sum(_nbytes(a) for a in const_args)

    budget = _physical_vmem_bytes() - (8 << 20)

    # Pick the largest batch block (divisor of B) that reaches ~TOKEN_TARGET
    # tokens per program and fits the VMEM budget -> fills the MXU M dimension.
    want = min(B, max(1, math.ceil(TOKEN_TARGET / N)))
    bb = 1
    for cand in sorted([d for d in range(1, B + 1) if B % d == 0 and d <= want],
                       reverse=True):
        bbytes = H * N * N * 4 * (1 if shared_bias else cand)
        if _layer_vmem_bytes(cand, N, D, I, H, const_bytes, bbytes) <= budget:
            bb = cand
            break
    # TODO(synk): when even bb == 1 exceeds the VMEM budget (very long token
    # sequences), switch to a flash-style query-tiled attention + token-tiled
    # FFN inner pipeline instead of relying on the vmem clamp.

    bias_block_bytes = H * N * N * 4 * (1 if shared_bias else bb)
    est = _layer_vmem_bytes(bb, N, D, I, H, const_bytes, bias_block_bytes)

    out_dtype = jnp.float32 if apply_final_ln else jnp.bfloat16

    if shared_bias:
        bias_spec = _const_spec(bias.shape)                       # (H, N, N), fetched once
    else:
        bias_spec = pl.BlockSpec((bb, H, N, N), lambda i: (i, 0, 0, 0))

    in_specs = [pl.BlockSpec((bb, N, D), lambda i: (i, 0, 0)), bias_spec]
    in_specs += [_const_spec(a.shape) for a in const_args]

    kernel = functools.partial(transformer_layer_kernel, heads=heads,
                               apply_final_ln=apply_final_ln,
                               bias_per_batch=not shared_bias)
    return pl.pallas_call(
        kernel,
        out_shape=jax.ShapeDtypeStruct((B, N, D), out_dtype),
        grid=(B // bb,),
        in_specs=in_specs,
        out_specs=pl.BlockSpec((bb, N, D), lambda i: (i, 0, 0)),
        compiler_params=pltpu.CompilerParams(
            dimension_semantics=("parallel",),
            vmem_limit_bytes=_vmem_limit(est)),
    )(x, bias, *const_args)


def final_layernorm(x2d, g, b, *, token_tile=TOKEN_TARGET):
    T, D = x2d.shape
    tm = T if T <= token_tile else max(8, (token_tile // 8) * 8)
    return pl.pallas_call(
        layernorm_tokens_kernel,
        out_shape=jax.ShapeDtypeStruct((T, D), jnp.float32),
        grid=(pl.cdiv(T, tm),),
        in_specs=[pl.BlockSpec((tm, D), lambda i: (i, 0)),
                  _const_spec(g.shape), _const_spec(b.shape)],
        out_specs=pl.BlockSpec((tm, D), lambda i: (i, 0)),
        compiler_params=pltpu.CompilerParams(dimension_semantics=("parallel",)),
    )(x2d, g, b)


# ----------------------------------------------------------------------------
# Parameter init + full ViT forward
# ----------------------------------------------------------------------------
def init_vit_params(key, dim, layers, in_channels, patch_size, ff_mult=4,
                    attention_heads=8):
    pixels_per_patch = patch_size * patch_size * in_channels
    inner = dim * ff_mult
    dim_head = dim // attention_heads
    q_scale = dim_head ** (-0.5)

    def nrm(k, shape, dtype, scale=0.02):
        return (scale * jax.random.normal(k, shape, dtype=jnp.float32)).astype(dtype)

    keys = iter(jax.random.split(key, 2 + 9 * max(layers, 1)))
    params = {
        "embed_w": nrm(next(keys), (dim, pixels_per_patch), jnp.bfloat16),
        "embed_b": nrm(next(keys), (1, dim), jnp.float32),
        "blocks": [],
        "final_g": jnp.ones((1, dim), jnp.float32),
        "final_b": jnp.zeros((1, dim), jnp.float32),
    }
    for _ in range(layers):
        wq_f32 = 0.02 * jax.random.normal(next(keys), (dim, dim), dtype=jnp.float32)
        blk = {
            "attn_ln_g": jnp.ones((1, dim), jnp.float32),
            "attn_ln_b": jnp.zeros((1, dim), jnp.float32),
            # NOTE: the 1/sqrt(dim_head) attention scale is folded into wq here.
            # When porting PyTorch weights, multiply W_q by dim_head**-0.5.
            "wq": (wq_f32 * q_scale).astype(jnp.bfloat16),
            "wk": nrm(next(keys), (dim, dim), jnp.bfloat16),
            "wv": nrm(next(keys), (dim, dim), jnp.bfloat16),
            "wo": nrm(next(keys), (dim, dim), jnp.bfloat16),
            "bo": nrm(next(keys), (1, dim), jnp.float32),
            "ffn_ln_g": jnp.ones((1, dim), jnp.float32),
            "ffn_ln_b": jnp.zeros((1, dim), jnp.float32),
            "w1": nrm(next(keys), (inner, dim), jnp.bfloat16),
            "b1": nrm(next(keys), (1, inner), jnp.float32),
            "w2": nrm(next(keys), (dim, inner), jnp.bfloat16),
            "b2": nrm(next(keys), (1, dim), jnp.float32),
        }
        params["blocks"].append(blk)
    return params


def patchify(imgs, patch_size):
    # einops: 'b c (h i) (w j) -> b (h w) (c i j)'
    B, C, H, W = imgs.shape
    p = patch_size
    x = imgs.reshape(B, C, H // p, p, W // p, p)
    x = jnp.transpose(x, (0, 2, 4, 1, 3, 5))  # b, h, w, c, i, j
    return x.reshape(B, (H // p) * (W // p), C * p * p)


def vit_forward(params, imgs, attn_bias, heads, patch_size):
    B = imgs.shape[0]
    x = patchify(imgs, patch_size).astype(jnp.bfloat16)       # (B, N, P) bf16
    _, N, P = x.shape
    x = patch_embed(x.reshape(B * N, P),
                    params["embed_w"], params["embed_b"])      # (B*N, D) bf16
    D = x.shape[-1]

    blocks = params["blocks"]
    if not blocks:
        out = final_layernorm(x, params["final_g"], params["final_b"])
        return out.reshape(B, N, D)

    # attention bias (ALiBi-style): slice to (.., N, N) as in PyTorch.
    if attn_bias is None:
        bias = jnp.zeros((1, heads, N, N), jnp.float32)
    else:
        bias = attn_bias[..., :N, :N].astype(jnp.float32)
    shared_bias = bias.shape[0] == 1
    if shared_bias:
        bias = bias[0]     # (H, N, N): fetched once per layer (constant index_map)

    x = x.reshape(B, N, D)
    for li, blk in enumerate(blocks):
        x = transformer_layer(
            x, bias, blk, params["final_g"], params["final_b"], heads,
            shared_bias=shared_bias,
            apply_final_ln=(li == len(blocks) - 1),
        )
    return x


# TODO(synk): mask_info / apply_mask_to_sequence (torch.gather over tokens) path
# is not exercised here; forward implemented for mask_info=None.

if __name__ == "__main__":
    # Small, forward-consistent shapes (lane-aligned hidden dim)
    B, C, IMG, PATCH = 2, 3, 16, 4
    DIM, LAYERS, HEADS = 128, 2, 4
    N = (IMG // PATCH) ** 2  # 16 patches

    key = jax.random.PRNGKey(0)
    k_img, k_bias, k_param = jax.random.split(key, 3)

    imgs = jax.random.normal(k_img, (B, C, IMG, IMG), dtype=jnp.float32)
    # batch-invariant ALiBi-style additive bias (broadcast over batch, as in PyTorch)
    attn_bias = 0.1 * jax.random.normal(k_bias, (1, HEADS, N, N), dtype=jnp.float32)

    params = init_vit_params(k_param, DIM, LAYERS, C, PATCH, attention_heads=HEADS)

    out = vit_forward(params, imgs, attn_bias, HEADS, PATCH)
    out = jax.block_until_ready(out)
    assert out.shape == (B, N, DIM)
    print("KERNEL_OK")
</pallas_src>

<mosaic_0001>
module attributes {stable_mosaic.version = 11 : i64} {
  func.func @_probe_kernel(%arg0: i32, %arg1: memref<8x128xf32, #tpu.memory_space<vmem>>, %arg2: memref<8x128xf32, #tpu.memory_space<vmem>>, %arg3: memref<8x128xf32, #tpu.memory_space<vmem>>) attributes {dimension_semantics = [#tpu.dimension_semantics<arbitrary>], iteration_bounds = array<i64: 2>, scalar_prefetch = 0 : i64, scratch_operands = 0 : i64, tpu.core_type = #tpu.core_type<tc>, window_params = [{transform_indices = @transform_0, window_bounds = array<i64: 8, 128>}, {pipeline_mode = #tpu.pipeline_mode<synchronous>, transform_indices = @transform_1, window_bounds = array<i64: 8, 128>}, {transform_indices = @transform_2, window_bounds = array<i64: 8, 128>}]} {
    %c0 = arith.constant 0 : index
    %c0_0 = arith.constant 0 : index
    %0 = vector.load %arg1[%c0, %c0_0] : memref<8x128xf32, #tpu.memory_space<vmem>>, vector<8x128xf32>
    %c0_1 = arith.constant 0 : index
    %c0_2 = arith.constant 0 : index
    %1 = vector.load %arg2[%c0_1, %c0_2] : memref<8x128xf32, #tpu.memory_space<vmem>>, vector<8x128xf32>
    %2 = arith.addf %0, %1 : vector<8x128xf32>
    %c0_3 = arith.constant 0 : index
    %c0_4 = arith.constant 0 : index
    %3 = vector.load %arg3[%c0_3, %c0_4] : memref<8x128xf32, #tpu.memory_space<vmem>>, vector<8x128xf32>
    tpu.vector_store %arg3[%c0_3, %c0_4], %2 {strides = array<i32>} : memref<8x128xf32, #tpu.memory_space<vmem>>, vector<8x128xf32>,
    return
  }
  func.func @transform_0(%arg0: i32) -> (i32, i32) {
    %c0_i32 = arith.constant 0 : i32
    %c0_i32_0 = arith.constant 0 : i32
    return %arg0, %c0_i32 : i32, i32
  }
  func.func @transform_1(%arg0: i32) -> (i32, i32) {
    %c0_i32 = arith.constant 0 : i32
    %c0_i32_0 = arith.constant 0 : i32
    %c0_i32_1 = arith.constant 0 : i32
    return %c0_i32, %c0_i32_0 : i32, i32
  }
  func.func @transform_2(%arg0: i32) -> (i32, i32) {
    %c0_i32 = arith.constant 0 : i32
    %c0_i32_0 = arith.constant 0 : i32
    return %arg0, %c0_i32 : i32, i32
  }
}

module attributes {stable_mosaic.version = 11 : i64} {
  func.func @patch_embed_kernel(%arg0: i32, %arg1: memref<32x48xbf16, #tpu.memory_space<vmem>>, %arg2: memref<128x48xbf16, #tpu.memory_space<vmem>>, %arg3: memref<1x128xf32, #tpu.memory_space<vmem>>, %arg4: memref<32x128xbf16, #tpu.memory_space<vmem>>) attributes {dimension_semantics = [#tpu.dimension_semantics<parallel>], iteration_bounds = array<i64: 1>, scalar_prefetch = 0 : i64, scratch_operands = 0 : i64, tpu.core_type = #tpu.core_type<tc>, window_params = [{transform_indices = @transform_0, window_bounds = array<i64: 32, 48>}, {pipeline_mode = #tpu.pipeline_mode<synchronous>, transform_indices = @transform_1, window_bounds = array<i64: 128, 48>}, {pipeline_mode = #tpu.pipeline_mode<synchronous>, transform_indices = @transform_2, window_bounds = array<i64: 1, 128>}, {transform_indices = @transform_3, window_bounds = array<i64: 32, 128>}]} {
    %c0 = arith.constant 0 : index
    %c0_0 = arith.constant 0 : index
    %0 = vector.load %arg1[%c0, %c0_0] : memref<32x48xbf16, #tpu.memory_space<vmem>>, vector<32x48xbf16>
    %c0_1 = arith.constant 0 : index
    %c0_2 = arith.constant 0 : index
    %1 = vector.load %arg2[%c0_1, %c0_2] : memref<128x48xbf16, #tpu.memory_space<vmem>>, vector<128x48xbf16>
    %cst = arith.constant dense<0.000000e+00> : vector<32x128xf32>
    %2 = tpu.matmul %0, %1, %cst {dimension_numbers = #tpu.dot_dimension_numbers<[1], [1], [0], [0], [0, 0, 1, 0], [], []>} : vector<32x48xbf16>, vector<128x48xbf16>, vector<32x128xf32> -> vector<32x128xf32>
    %c0_3 = arith.constant 0 : index
    %c0_4 = arith.constant 0 : index
    %3 = vector.load %arg3[%c0_3, %c0_4] : memref<1x128xf32, #tpu.memory_space<vmem>>, vector<1x128xf32>
    %4 = vector.broadcast %3 : vector<1x128xf32> to vector<32x128xf32>
    %5 = arith.addf %2, %4 : vector<32x128xf32>
    %6 = arith.truncf %5 : vector<32x128xf32> to vector<32x128xbf16>
    %c0_5 = arith.constant 0 : index
    %c0_6 = arith.constant 0 : index
    %7 = vector.load %arg4[%c0_5, %c0_6] : memref<32x128xbf16, #tpu.memory_space<vmem>>, vector<32x128xbf16>
    tpu.vector_store %arg4[%c0_5, %c0_6], %6 {strides = array<i32>} : memref<32x128xbf16, #tpu.memory_space<vmem>>, vector<32x128xbf16>,
    return
  }
  func.func @transform_0(%arg0: i32) -> (i32, i32) {
    %c0_i32 = arith.constant 0 : i32
    %c0_i32_0 = arith.constant 0 : i32
    return %arg0, %c0_i32 : i32, i32
  }
  func.func @transform_1(%arg0: i32) -> (i32, i32) {
    %c0_i32 = arith.constant 0 : i32
    %c0_i32_0 = arith.constant 0 : i32
    %c0_i32_1 = arith.constant 0 : i32
    return %c0_i32, %c0_i32_0 : i32, i32
  }
  func.func @transform_2(%arg0: i32) -> (i32, i32) {
    %c0_i32 = arith.constant 0 : i32
    %c0_i32_0 = arith.constant 0 : i32
    %c0_i32_1 = arith.constant 0 : i32
    return %c0_i32, %c0_i32_0 : i32, i32
  }
  func.func @transform_3(%arg0: i32) -> (i32, i32) {
    %c0_i32 = arith.constant 0 : i32
    %c0_i32_0 = arith.constant 0 : i32
    return %arg0, %c0_i32 : i32, i32
  }
}

</mosaic_0001>

<llo_original>
// kernel: tpu_custom_call.1
$region0: #{tpu_custom_call.1}
  #allocation0 [shape = 'u32[]', space=smem, size = 0x4, offset = 0x4, fixed_abs, tag = 'smem constant byte address 0x4 - core index']
  #allocation1 [shape = 'u32[144,128]{1,0:T(1,128)}', space=vmem, size = 0x12000, scoped, tag = 'internal scratch']
  %s0 = inlined_call_operand.hbm [shape: f32[16,128], index: 0, kind: input, shape index: {}]
  %s1 = inlined_call_operand.hbm [shape: f32[8,128], index: 1, kind: input, shape index: {}]
  %s2 = inlined_call_operand.hbm [shape: f32[16,128], index: 2, kind: output, shape index: {}]
  %s3 = sld [smem:[#allocation0]]
  $region49: #{tpu_custom_call.1} parent=0
    _
  %s5 = ssub.s32 1, %s3
  %s6 = scalar_select 0, %s5, %s3
  $region1: #{tpu_custom_call.1} parent=0
    #allocation2 [shape = 'u8[8192]{0}', space=vmem, size = 0x2000, scoped, tag = 'input window, operand 0']
    #allocation3 [shape = 's32[2]{0}', space=sflag, size = 0x8, scoped, tag = 'scoped memory for tpu_custom_call.1']
    #allocation4 [shape = 's32[2]{0}', space=sflag, size = 0x8, scoped, tag = 'scoped memory for tpu_custom_call.1']
    #allocation5 [shape = 'u8[4096]{0}', space=vmem, size = 0x1000, scoped, tag = 'input window, operand 1, single buffered']
    #allocation6 [shape = 's32[1]{0}', space=sflag, size = 0x4, scoped, tag = 'scoped memory for tpu_custom_call.1']
    #allocation7 [shape = 'u8[8192]{0}', space=vmem, size = 0x2000, scoped, tag = 'output window, operand 0']
    %7 = vsyncpa [#allocation3], 0
    %s8 = scalar_lea.sflag [#allocation3], 1
    %9 = vsyncpa %s8, 0
    %10 = vsyncpa [#allocation6], 0
    %11 = vsyncpa [#allocation4], 0
    %s12 = scalar_lea.sflag [#allocation4], 1
    %13 = vsyncpa %s12, 0
    loop: start=0, step=1, limit=4
    $region2: #{tpu_custom_call.1} parent=1 // loop_pre_header
      _
    $region3: #{tpu_custom_call.1} parent=1 // loop_header
      %s15 = sphi 0, %s19
      %p16 = scmp.ge.s32.totalorder %s15, 4
      %s25 = sphi 0, %s27
      %s28 = sphi 0, %s25
      %s29 = sphi 0, %s28
      %s45 = sphi 0, %s29
      %s49 = sphi 0, %s49
      %s51 = sphi 0, %s49
      %s52 = sphi 0, %s51
      %s66 = sphi 0, %s52
      %s72 = sphi 0, %s74
      %s75 = sphi 0, %s72
      %s76 = sphi 0, %s75
      %s92 = sphi 0, %s76
    $region4: #{tpu_custom_call.1} parent=1 // loop_header_branch
      %18 = sbr.rel (%p16) target = $region8
    $region5: #{tpu_custom_call.1} parent=1 // loop_body
      %s20 = ssub.s32 %s15, 1
      %s21 = ssub.s32 %s15, 2
      %s22 = sadd.s32 %s15, 1
      %s23 = ssub.s32 %s15, %s22
      %p24 = scmp.eq.s32.totalorder %s23, 0
      %s26 = sadd.s32 %s25, 1
      %s27 = scalar_select %p24, %s25, %s26
      %p30 = pneg %p24
      %p31 = scmp.eq.s32.totalorder %s15, 1
      %p32 = por %p30, %p31
      %p33 = scmp.ne.s32.totalorder %s25, %s28
      %p34 = scmp.eq.s32.totalorder %s15, 0
      %p35 = por %p33, %p34
      %p36 = scmp.ne.s32.totalorder %s25, %s28
      %p37 = scmp.eq.s32.totalorder %s20, 1
      %p38 = por %p36, %p37
      %p39 = scmp.ne.s32.totalorder %s28, %s29
      %p40 = scmp.eq.s32.totalorder %s20, 0
      %p41 = por %p39, %p40
      %p42 = scmp.ne.s32.totalorder %s28, %s29
      %p43 = scmp.eq.s32.totalorder %s21, 1
      %p44 = por %p42, %p43
      %p46 = scmp.ne.s32.totalorder %s29, %s45
      %p47 = scmp.eq.s32.totalorder %s21, 0
      %p48 = por %p46, %p47
      %s50 = sadd.s32 %s49, 1
      %p53 = scmp.eq.s32.totalorder %s15, 1
      %p54 = scmp.ne.s32.totalorder %s49, %s51
      %p55 = scmp.eq.s32.totalorder %s15, 0
      %p56 = por %p54, %p55
      %p57 = scmp.ne.s32.totalorder %s49, %s51
      %p58 = scmp.eq.s32.totalorder %s20, 1
      %p59 = por %p57, %p58
      %p60 = scmp.ne.s32.totalorder %s51, %s52
      %p61 = scmp.eq.s32.totalorder %s20, 0
      %p62 = por %p60, %p61
      %p63 = scmp.ne.s32.totalorder %s51, %s52
      %p64 = scmp.eq.s32.totalorder %s21, 1
      %p65 = por %p63, %p64
      %p67 = scmp.ne.s32.totalorder %s52, %s66
      %p68 = scmp.eq.s32.totalorder %s21, 0
      %p69 = por %p67, %p68
      %s70 = ssub.s32 %s15, %s22
      %p71 = scmp.eq.s32.totalorder %s70, 0
      %s73 = sadd.s32 %s72, 1
      %s74 = scalar_select %p71, %s72, %s73
      %p77 = pneg %p71
      %p78 = scmp.eq.s32.totalorder %s15, 1
      %p79 = por %p77, %p78
      %p80 = scmp.ne.s32.totalorder %s72, %s75
      %p81 = scmp.eq.s32.totalorder %s15, 0
      %p82 = por %p80, %p81
      %p83 = scmp.ne.s32.totalorder %s72, %s75
      %p84 = scmp.eq.s32.totalorder %s20, 1
      %p85 = por %p83, %p84
      %p86 = scmp.ne.s32.totalorder %s75, %s76
      %p87 = scmp.eq.s32.totalorder %s20, 0
      %p88 = por %p86, %p87
      %p89 = scmp.ne.s32.totalorder %s75, %s76
      %p90 = scmp.eq.s32.totalorder %s21, 1
      %p91 = por %p89, %p90
      %p93 = scmp.ne.s32.totalorder %s76, %s92
      %p94 = scmp.eq.s32.totalorder %s21, 0
      %p95 = por %p93, %p94
      %p96 = scmp.le.s32.totalorder 1, %s15
      %p97 = scmp.lt.s32.totalorder %s15, 3
      %p98 = pnand %p96, %p97
      %p99 = pneg %p98
      // Predicated region
      $region9: #{tpu_custom_call.1} parent=5 // pred_check
        _
      $region10: #{tpu_custom_call.1} parent=5 // pred_check_branch
        %101 = sbr.rel (%p98) target = $region12
      $region11: #{tpu_custom_call.1} parent=5 // pred_region
        %s102 = ssub.s32 %s15, 1
        // Predicated region
        $region13: #{tpu_custom_call.1} parent=11 // pred_check
          %p103 = pneg %p62
        $region14: #{tpu_custom_call.1} parent=11 // pred_check_branch
          %105 = sbr.rel (%p103) target = $region16
        $region15: #{tpu_custom_call.1} parent=11 // pred_region
          %s107 = ssub.s32 128, 128
          %108 = vsyncadd [#allocation6], %s107
          %s110 = sshll.u32 [#allocation5], 4
          %s111 = int_to_ptr.vmem [resolvable:$true] %s110
          %113 = dma.hbm_to_vmem [thread:$0]  %s1, 128, %s111, [#allocation6]
        $region16: #{tpu_custom_call.1} parent=11 // pred_fallthru
          _
      $region12: #{tpu_custom_call.1} parent=5 // pred_fallthru
        _
      %p114 = scmp.lt.s32.totalorder %s15, 2
      // Predicated region
      $region17: #{tpu_custom_call.1} parent=5 // pred_check
        %p115 = pneg %p114
      $region18: #{tpu_custom_call.1} parent=5 // pred_check_branch
        %117 = sbr.rel (%p115) target = $region20
      $region19: #{tpu_custom_call.1} parent=5 // pred_region
        // Predicated region
        $region21: #{tpu_custom_call.1} parent=19 // pred_check
          %p118 = pneg %p35
        $region22: #{tpu_custom_call.1} parent=19 // pred_check_branch
          %120 = sbr.rel (%p118) target = $region24
        $region23: #{tpu_custom_call.1} parent=19 // pred_region
          %s121 = sand.u32 %s25, 1
          %s122 = scalar_lea.sflag [#allocation3], %s121
          %s123 = sand.u32 %s25, 1
          %s124 = smul.addr %s123, 8
          %s125 = scalar_lea.vmem [#allocation2], %s124
          %s127 = ssub.s32 128, 128
          %128 = vsyncadd %s122, %s127
          %s129 = smul.addr %s15, 128
          %s130 = scalar_lea.hbm %s0, %s129
          %s132 = sshll.u32 %s125, 4
          %s133 = int_to_ptr.vmem [resolvable:$true] %s132
          %135 = dma.hbm_to_vmem [thread:$0]  %s130, 128, %s133, %s122
        $region24: #{tpu_custom_call.1} parent=19 // pred_fallthru
          _
      $region20: #{tpu_custom_call.1} parent=5 // pred_fallthru
        _
      %p136 = scmp.le.s32.totalorder 1, %s15
      %p137 = scmp.lt.s32.totalorder %s15, 3
      %p138 = pnand %p136, %p137
      %p139 = pneg %p138
      // Predicated region
      $region25: #{tpu_custom_call.1} parent=5 // pred_check
        _
      $region26: #{tpu_custom_call.1} parent=5 // pred_check_branch
        %141 = sbr.rel (%p138) target = $region28
      $region27: #{tpu_custom_call.1} parent=5 // pred_region
        %s142 = ssub.s32 %s15, 1
        %s143 = sand.u32 %s28, 1
        %s144 = scalar_lea.sflag [#allocation3], %s143
        %s145 = sand.u32 %s28, 1
        %s146 = smul.addr %s145, 8
        %s147 = scalar_lea.vmem [#allocation2], %s146
        // Predicated region
        $region29: #{tpu_custom_call.1} parent=27 // pred_check
          %p148 = pneg %p41
        $region30: #{tpu_custom_call.1} parent=27 // pred_check_branch
          %150 = sbr.rel (%p148) target = $region32
        $region31: #{tpu_custom_call.1} parent=27 // pred_region
          %151 = dma.done %s144, 128
        $region32: #{tpu_custom_call.1} parent=27 // pred_fallthru
          _
        // Predicated region
        $region33: #{tpu_custom_call.1} parent=27 // pred_check
          %p152 = pneg %p62
        $region34: #{tpu_custom_call.1} parent=27 // pred_check_branch
          %154 = sbr.rel (%p152) target = $region36
        $region35: #{tpu_custom_call.1} parent=27 // pred_region
          %155 = dma.done [#allocation6], 128
        $region36: #{tpu_custom_call.1} parent=27 // pred_fallthru
          _
        %s156 = sand.u32 %s28, 1
        %s157 = scalar_lea.sflag [#allocation3], %s156
        %s158 = sand.u32 %s28, 1
        %s159 = smul.addr %s158, 8
        %s160 = scalar_lea.vmem [#allocation2], %s159
        %p161 = pneg %p41
        %p162 = pneg %p38
        %p163 = pneg %p62
        %p164 = pneg %p59
        %p165 = pneg %p88
        %p166 = pneg %p85
        %s167 = sand.u32 %s75, 1
        %s168 = scalar_lea.sflag [#allocation4], %s167
        %s169 = sand.u32 %s75, 1
        %s170 = smul.addr %s169, 8
        %s171 = scalar_lea.vmem [#allocation7], %s170
        %v172 = vld [vmem:[%s147] sm:$0xff]
        %v173 = vld [vmem:[#allocation5] sm:$0xff]
        %v174 = vadd.f32 %v172, %v173
        %175 = vst [vmem:[%s171] sm:$0xff] %v174
        %s176 = sand.u32 %s75, 1
        %s177 = scalar_lea.sflag [#allocation4], %s176
        %s178 = sand.u32 %s75, 1
        %s179 = smul.addr %s178, 8
        %s180 = scalar_lea.vmem [#allocation7], %s179
        // Predicated region
        $region37: #{tpu_custom_call.1} parent=27 // pred_check
          %p181 = pneg %p85
        $region38: #{tpu_custom_call.1} parent=27 // pred_check_branch
          %183 = sbr.rel (%p181) target = $region40
        $region39: #{tpu_custom_call.1} parent=27 // pred_region
          %s185 = ssub.s32 128, 128
          %186 = vsyncadd %s177, %s185
          %s187 = smul.addr %s20, 128
          %s188 = scalar_lea.hbm %s2, %s187
          %s190 = sshll.u32 %s180, 4
          %s191 = int_to_ptr.vmem [resolvable:$true] %s190
          %193 = dma.vmem_to_hbm [thread:$0]  %s191, 128, %s188, %s177
        $region40: #{tpu_custom_call.1} parent=27 // pred_fallthru
          _
      $region28: #{tpu_custom_call.1} parent=5 // pred_fallthru
        _
      %p194 = scmp.le.s32.totalorder 2, %s15
      // Predicated region
      $region41: #{tpu_custom_call.1} parent=5 // pred_check
        %p195 = pneg %p194
      $region42: #{tpu_custom_call.1} parent=5 // pred_check_branch
        %197 = sbr.rel (%p195) target = $region44
      $region43: #{tpu_custom_call.1} parent=5 // pred_region
        %s198 = ssub.s32 %s15, 2
        // Predicated region
        $region45: #{tpu_custom_call.1} parent=43 // pred_check
          %p199 = pneg %p91
        $region46: #{tpu_custom_call.1} parent=43 // pred_check_branch
          %201 = sbr.rel (%p199) target = $region48
        $region47: #{tpu_custom_call.1} parent=43 // pred_region
          %s202 = sand.u32 %s76, 1
          %s203 = scalar_lea.sflag [#allocation4], %s202
          %s204 = sand.u32 %s76, 1
          %s205 = smul.addr %s204, 8
          %s206 = scalar_lea.vmem [#allocation7], %s205
          %207 = dma.done %s203, 128
        $region48: #{tpu_custom_call.1} parent=43 // pred_fallthru
          _
      $region44: #{tpu_custom_call.1} parent=5 // pred_fallthru
        _
    $region6: #{tpu_custom_call.1} parent=1 // loop_footer
      %s19 = sadd.s32 1, %s15
    $region7: #{tpu_custom_call.1} parent=1 // loop_footer_branch
      %14 = sbr.rel target = $region3
    $region8: #{tpu_custom_call.1} parent=1 // loop_exit
      _
    %208 = vsyncpa [#allocation3], 1
    %s209 = scalar_lea.sflag [#allocation3], 1
    %210 = vsyncpa %s209, 1
    %211 = vsyncpa [#allocation6], 1
    %212 = vsyncpa [#allocation4], 1
    %s213 = scalar_lea.sflag [#allocation4], 1
    %214 = vsyncpa %s213, 1

// kernel: tpu_custom_call.1
$region0: #{tpu_custom_call.1}
  #allocation0 [shape = 'u32[]', space=smem, size = 0x4, offset = 0x4, fixed_abs, tag = 'smem constant byte address 0x4 - core index']
  #allocation1 [shape = 'u32[144,128]{1,0:T(1,128)}', space=vmem, size = 0x12000, scoped, tag = 'internal scratch']
  %s0 = inlined_call_operand.vmem [shape: bf16[32,48], index: 0, kind: input, shape index: {}]
  %s1 = inlined_call_operand.vmem [shape: bf16[128,48], index: 1, kind: input, shape index: {}]
  %s2 = inlined_call_operand.vmem [shape: f32[1,128], index: 2, kind: input, shape index: {}]
  %s3 = inlined_call_operand.hbm [shape: bf16[32,128], index: 3, kind: output, shape index: {}]
  %s4 = sld [smem:[#allocation0]]
  $region22: #{tpu_custom_call.1} parent=0
    _
  %s6 = ssub.s32 1, %s4
  %s7 = scalar_select 0, %s6, %s4
  $region1: #{tpu_custom_call.1} parent=0
    #allocation2 [shape = 'u8[8192]{0}', space=vmem, size = 0x2000, scoped, tag = 'output window, operand 0, single buffered']
    #allocation3 [shape = 's32[1]{0}', space=sflag, size = 0x4, scoped, tag = 'scoped memory for tpu_custom_call.1']
    %8 = vsyncpa [#allocation3], 0
    // Predicated region
    $region2: #{tpu_custom_call.1} parent=1 // pred_check
      _
    $region3: #{tpu_custom_call.1} parent=1 // pred_check_branch
      %10 = sbr.rel (0) target = $region5
    $region4: #{tpu_custom_call.1} parent=1 // pred_region
      _
    $region5: #{tpu_custom_call.1} parent=1 // pred_fallthru
      _
    // Predicated region
    $region6: #{tpu_custom_call.1} parent=1 // pred_check
      _
    $region7: #{tpu_custom_call.1} parent=1 // pred_check_branch
      %12 = sbr.rel (0) target = $region9
    $region8: #{tpu_custom_call.1} parent=1 // pred_region
      _
    $region9: #{tpu_custom_call.1} parent=1 // pred_fallthru
      _
    // Predicated region
    $region10: #{tpu_custom_call.1} parent=1 // pred_check
      _
    $region11: #{tpu_custom_call.1} parent=1 // pred_check_branch
      %14 = sbr.rel (0) target = $region13
    $region12: #{tpu_custom_call.1} parent=1 // pred_region
      _
    $region13: #{tpu_custom_call.1} parent=1 // pred_fallthru
      _
    %v16 = vld [vmem:[%s0] sm:$0xf]
    %v17 = vld [vmem:[%s0 + $0x4] sm:$0xf]
    %v18 = vld [vmem:[%s0 + $0x8] sm:$0xf]
    %v19 = vld [vmem:[%s0 + $0xc] sm:$0xf]
    %v20 = vld [vmem:[%s1] sm:$0xf]
    %v21 = vld [vmem:[%s1 + $0x4] sm:$0xf]
    %v22 = vld [vmem:[%s1 + $0x8] sm:$0xf]
    %v23 = vld [vmem:[%s1 + $0xc] sm:$0xf]
    %v24 = vld [vmem:[%s1 + $0x10] sm:$0xf]
    %v25 = vld [vmem:[%s1 + $0x14] sm:$0xf]
    %v26 = vld [vmem:[%s1 + $0x18] sm:$0xf]
    %v27 = vld [vmem:[%s1 + $0x1c] sm:$0xf]
    %v28 = vld [vmem:[%s1 + $0x20] sm:$0xf]
    %v29 = vld [vmem:[%s1 + $0x24] sm:$0xf]
    %v30 = vld [vmem:[%s1 + $0x28] sm:$0xf]
    %v31 = vld [vmem:[%s1 + $0x2c] sm:$0xf]
    %v32 = vld [vmem:[%s1 + $0x30] sm:$0xf]
    %v33 = vld [vmem:[%s1 + $0x34] sm:$0xf]
    %v34 = vld [vmem:[%s1 + $0x38] sm:$0xf]
    %v35 = vld [vmem:[%s1 + $0x3c] sm:$0xf]
    %v36 = vld [vmem:[%s2] sm:$0x1]
    %v38 = vlaneseq
    %v39 = vshrl.u32 %v38, 7
    %v40 = vsub.s32 0, %v39
    %v41 = vrot.slane %v36, %v40
    %v47 = vunpack.c.l.b16 %v16
    %v48 = vunpack.c.l.b16 %v17
    %v49 = vunpack.c.l.b16 %v18
    %v50 = vunpack.c.l.b16 %v19
    %v51 = vpack.c.b16 %v48, %v47
    %v52 = vpack.c.b16 %v50, %v49
    %v69 = vunpack.c.l.b16 %v20
    %v70 = vunpack.c.l.b16 %v21
    %v71 = vunpack.c.l.b16 %v22
    %v72 = vunpack.c.l.b16 %v23
    %v73 = vunpack.c.l.b16 %v24
    %v74 = vunpack.c.l.b16 %v25
    %v75 = vunpack.c.l.b16 %v26
    %v76 = vunpack.c.l.b16 %v27
    %v77 = vunpack.c.l.b16 %v28
    %v78 = vunpack.c.l.b16 %v29
    %v79 = vunpack.c.l.b16 %v30
    %v80 = vunpack.c.l.b16 %v31
    %v81 = vunpack.c.l.b16 %v32
    %v82 = vunpack.c.l.b16 %v33
    %v83 = vunpack.c.l.b16 %v34
    %v84 = vunpack.c.l.b16 %v35
    %v85 = vpack.c.b16 %v70, %v69
    %v86 = vpack.c.b16 %v72, %v71
    %v87 = vpack.c.b16 %v74, %v73
    %v88 = vpack.c.b16 %v76, %v75
    %v89 = vpack.c.b16 %v78, %v77
    %v90 = vpack.c.b16 %v80, %v79
    %v91 = vpack.c.b16 %v82, %v81
    %v92 = vpack.c.b16 %v84, %v83
    %vm93 = vcmask 392192
    %v95 = vsel %vm93, %v51, 0
    %v98 = vsel %vm93, %v52, 0
    %v101 = vsel %vm93, %v85, 0
    %v104 = vsel %vm93, %v86, 0
    %v107 = vsel %vm93, %v87, 0
    %v110 = vsel %vm93, %v88, 0
    %v113 = vsel %vm93, %v89, 0
    %v116 = vsel %vm93, %v90, 0
    %v119 = vsel %vm93, %v91, 0
    %v122 = vsel %vm93, %v92, 0
    %124 = vmatprep.subr.bf16.mxu0 0
    %125 = vmatpush1.bf16.xpose.msra.mxu0 %v101
    %126 = vmatprep.subr.bf16.mxu0 0
    %127 = vmatpush1.bf16.xpose.msra.mxu0 %v104
    %128 = vmatprep.subr.bf16.mxu0 0
    %129 = vmatpush1.bf16.xpose.msra.mxu0 %v107
    %130 = vmatprep.subr.bf16.mxu0 0
    %131 = vmatpush1.bf16.xpose.msra.mxu0 %v110
    %132 = vmatprep.subr.bf16.mxu0 0
    %133 = vmatpush1.bf16.xpose.msra.mxu0 %v113
    %134 = vmatprep.subr.bf16.mxu0 0
    %135 = vmatpush1.bf16.xpose.msra.mxu0 %v116
    %136 = vmatprep.subr.bf16.mxu0 0
    %137 = vmatpush1.bf16.xpose.msra.mxu0 %v119
    %138 = vmatprep.subr.bf16.mxu0 0
    %139 = vmatpush1.bf16.xpose.msra.mxu0 %v122
    %140 = vmatprep.subr.bf16.mxu0 0
    %141 = vmatpush1.bf16.xpose.msra.mxu0 0
    %142 = vmatprep.subr.bf16.mxu0 0
    %143 = vmatpush1.bf16.xpose.msra.mxu0 0
    %144 = vmatprep.subr.bf16.mxu0 0
    %145 = vmatpush1.bf16.xpose.msra.mxu0 0
    %146 = vmatprep.subr.bf16.mxu0 0
    %147 = vmatpush1.bf16.xpose.msra.mxu0 0
    %148 = vmatprep.subr.bf16.mxu0 0
    %149 = vmatpush1.bf16.xpose.msra.mxu0 0
    %150 = vmatprep.subr.bf16.mxu0 0
    %151 = vmatpush1.bf16.xpose.msra.mxu0 0
    %152 = vmatprep.subr.bf16.mxu0 0
    %153 = vmatpush1.bf16.xpose.msra.mxu0 0
    %154 = vmatprep.subr.bf16.mxu0 0
    %155 = vmatpush1.bf16.xpose.msra.mxu0 0
    %156 = vmatprep.mubr.bf16.mxu0 0
    %157 = vmatmul.mubr.bf16.gmra.mrb[0].mxu0 %v95
    %v158 = vpop.f32.mrb[0].mxu0
    %v159 = vadd.f32 %v41, %v158
    %v160 = vpop.f32.mrb[0].mxu0
    %v161 = vpop.f32.mrb[0].mxu0
    %v162 = vadd.f32 %v41, %v161
    %v163 = vpop.f32.mrb[0].mxu0
    %164 = vmatprep.mubr.bf16.mxu0 0
    %165 = vmatmul.mubr.bf16.gmra.mrb[0].mxu0 %v98
    %v166 = vpop.f32.mrb[0].mxu0
    %v167 = vadd.f32 %v41, %v166
    %v168 = vpop.f32.mrb[0].mxu0
    %v169 = vpop.f32.mrb[0].mxu0
    %v170 = vadd.f32 %v41, %v169
    %v171 = vpop.f32.mrb[0].mxu0
    %172 = vdwg.mxu0
    %v173 = vpack.c.bf16 %v162, %v159
    %v174 = vpack.c.bf16 %v170, %v167
    %v177 = vunpack.c.l.b16 %v173
    %v178 = vunpack.c.h.b16 %v173
    %v179 = vunpack.c.l.b16 %v174
    %v180 = vunpack.c.h.b16 %v174
    %v181 = vpack.c.b16 %v177, %v177
    %v182 = vpack.c.b16 %v178, %v178
    %v183 = vpack.c.b16 %v179, %v179
    %v184 = vpack.c.b16 %v180, %v180
    %189 = vst [vmem:[#allocation2] sm:$0xf] %v181
    %190 = vst [vmem:[#allocation2 + $0x4] sm:$0xf] %v182
    %191 = vst [vmem:[#allocation2 + $0x8] sm:$0xf] %v183
    %192 = vst [vmem:[#allocation2 + $0xc] sm:$0xf] %v184
    // Predicated region
    $region14: #{tpu_custom_call.1} parent=1 // pred_check
      _
    $region15: #{tpu_custom_call.1} parent=1 // pred_check_branch
      %194 = sbr.rel (0) target = $region17
    $region16: #{tpu_custom_call.1} parent=1 // pred_region
      %s196 = ssub.s32 256, 256
      %197 = vsyncadd [#allocation3], %s196
      %s198 = sshll.u32 [#allocation2], 4
      %s199 = int_to_ptr.vmem [resolvable:$true] %s198
      %204 = dma.vmem_to_hbm [thread:$0]  %s199, 256, %s3, [#allocation3], 64, 64, 4
    $region17: #{tpu_custom_call.1} parent=1 // pred_fallthru
      _
    // Predicated region
    $region18: #{tpu_custom_call.1} parent=1 // pred_check
      _
    $region19: #{tpu_custom_call.1} parent=1 // pred_check_branch
      %206 = sbr.rel (0) target = $region21
    $region20: #{tpu_custom_call.1} parent=1 // pred_region
      %207 = dma.done [#allocation3], 256
    $region21: #{tpu_custom_call.1} parent=1 // pred_fallthru
      _
    %208 = vsyncpa [#allocation3], 1

</llo_original>
